<compile_context>
chip_gen: v5e
topology: v5e:2x2
jax: 0.10.0
libtpu: 0.0.40
codegen_flags: <defaults>
</compile_context>

<pallas_src>
import jax
import jax.numpy as jnp
from jax import lax
from jax.experimental import pallas as pl
from jax.experimental.pallas import tpu as pltpu

NEG_SLOPE = 0.2               # GATConv default negative_slope
DROP_P = 0.5                  # nn.Dropout(p=0.5)
INV_KEEP = 1.0 / (1.0 - DROP_P)
EPS = 1e-12                   # F.normalize default eps
MASKED = -1e30                # logit fill for non-edges
M_INIT = -1e20                # running-max init; M_INIT >> MASKED so exp(MASKED - m) == 0 exactly
SUBLANES = 8                  # att_src is replicated to 8 rows so the tiny matmul is sublane-aligned


def _block_spec(shape, index_map, buffer_depth=None):
    """BlockSpec with optional pl.Buffered(depth) multi-buffering; falls back if unsupported."""
    if buffer_depth is not None:
        try:
            return pl.BlockSpec(shape, index_map, pipeline_mode=pl.Buffered(buffer_depth))
        except (AttributeError, TypeError):
            pass
    return pl.BlockSpec(shape, index_map)


def project_kernel(x_ref, w_ref, adst_ref, h_ref, ad_ref):
    # h = x @ W on the MXU (bf16 operands, f32 accumulate).
    h = jnp.dot(x_ref[...], w_ref[...], preferred_element_type=jnp.float32)   # (TM, F_out) f32
    h_ref[...] = h.astype(h_ref.dtype)                                        # bf16 for kernel 2
    # a_dst . h_i: VPU multiply + lane reduce, emitted in the (TM, 1) orientation kernel 2 wants.
    ad_ref[...] = jnp.sum(h * adst_ref[...], axis=-1, keepdims=True)


def attend_kernel(kidx_ref, cnt_ref, ad_ref, asrc_ref, adj_ref, h_ref, bias_ref, drop_ref,
                  out_ref, m_sc, l_sc, acc_sc):
    i = pl.program_id(0)
    k = pl.program_id(1)
    nk = pl.num_programs(1)

    @pl.when(k == 0)
    def _init():
        m_sc[...] = jnp.full_like(m_sc[...], M_INIT)
        l_sc[...] = jnp.zeros_like(l_sc[...])
        acc_sc[...] = jnp.zeros_like(acc_sc[...])

    # Only the first cnt[i] reduction steps carry real (non-empty) column tiles; the padded steps
    # re-point at the last valid tile (no new DMA) and are skipped here.
    @pl.when(k < cnt_ref[i])
    def _update():
        h_blk = h_ref[...]                                                    # (TK, F_out) bf16
        # a_src . h_j recomputed lane-dense from the resident h tile: (8,F)x(TK,F)^T on the MXU,
        # then take row 0 -> (1, TK).  ~0.4% extra MXU work vs the main P.h matmul.
        asr = lax.dot_general(
            asrc_ref[...].astype(h_blk.dtype), h_blk,
            dimension_numbers=(((1,), (1,)), ((), ())),
            preferred_element_type=jnp.float32)[0:1, :]                       # (1, TK) f32
        # e[r, c] = LeakyReLU(a_dst.h_r + a_src.h_c), MASKED where there is no edge c -> r.
        e = ad_ref[...] + asr                                                 # (TM,1)+(1,TK)
        e = jnp.maximum(e, NEG_SLOPE * e)                                     # fused LeakyReLU(0.2)
        e = jnp.where(adj_ref[...] > 0, e, MASKED)
        # Online-softmax update.  m >= M_INIT >> MASKED, so masked entries give exactly 0.
        m_new = jnp.maximum(m_sc[...], jnp.max(e, axis=-1, keepdims=True))
        scale = jnp.exp(m_sc[...] - m_new)
        p = jnp.exp(e - m_new)
        l_sc[...] = scale * l_sc[...] + jnp.sum(p, axis=-1, keepdims=True)
        acc_sc[...] = scale * acc_sc[...] + jnp.dot(
            p.astype(h_blk.dtype), h_blk, preferred_element_type=jnp.float32)
        m_sc[...] = m_new

    @pl.when(k == nk - 1)
    def _finalize():
        # Self-loops guarantee l > 0 for every destination row.
        inv_l = pl.reciprocal(l_sc[...], approx=True)                         # EUP slot, ~free
        out = acc_sc[...] * inv_l + bias_ref[...]                             # softmax norm + bias
        out = jnp.where(drop_ref[...] != 0, out * INV_KEEP, 0.0)              # dropout (uint8 mask)
        sumsq = jnp.sum(out * out, axis=-1, keepdims=True)                    # F.normalize (L2)
        out_ref[...] = (out * lax.rsqrt(jnp.maximum(sumsq, EPS * EPS))).astype(out_ref.dtype)


def graph_conv_forward(x, edge_index, w, att_src, att_dst, bias, dropout_key, *, tm=256, tk=256):
    """x: (N, F_in) f32, edge_index: (2, E) int32 [src; dst]."""
    n, f_in = x.shape
    f_out = w.shape[1]
    tm = min(tm, n)
    tk = min(tk, n)
    # TODO(synk): ragged N (padded last tiles) is unsupported; it would need masking in the tile
    # occupancy and in the L2-normalize.
    assert n % tm == 0 and n % tk == 0
    nrt, nct = n // tm, n // tk

    src, dst = edge_index[0], edge_index[1]
    diag = jnp.arange(n, dtype=jnp.int32)

    # ---- O(E) host glue -------------------------------------------------------------------------
    # Dense int8 adjacency adj[i, j] = 1 iff edge j -> i, plus self-loops (GATConv add_self_loops).
    adj8 = jnp.zeros((n, n), jnp.int8).at[dst, src].set(1).at[diag, diag].set(1)

    # Tile occupancy straight from edge tile coordinates (no dense N^2 reduction).
    occ = jnp.zeros((nrt * nct,), jnp.int32)
    occ = occ.at[(dst // tm) * nct + (src // tk)].add(1)
    occ = occ.at[(diag // tm) * nct + (diag // tk)].add(1)        # self-loop (diagonal) tiles
    nonempty = (occ > 0).reshape(nrt, nct)

    # Compacted non-empty column-tile indices per row tile (block-sparse flash-attention style):
    # non-empty k's first (ascending), padding clamped to the last valid index (no extra DMA).
    ks = jnp.arange(nct, dtype=jnp.int32)
    kidx_full = jnp.argsort(jnp.where(nonempty, ks[None, :], nct + ks[None, :]), axis=1)
    kidx_full = kidx_full.astype(jnp.int32)
    counts = jnp.sum(nonempty, axis=1).astype(jnp.int32)          # >= 1 thanks to self-loops
    last_valid = jnp.take_along_axis(kidx_full, jnp.maximum(counts - 1, 0)[:, None], axis=1)
    kidx_full = jnp.where(ks[None, :] >= counts[:, None], last_valid, kidx_full)

    # Static bound for the reduction grid axis.
    # TODO(synk): under jit the wrapper would need a static kmax bound passed in instead.
    kmax = int(jax.device_get(jnp.max(counts)))
    kidx = kidx_full[:, :kmax].reshape(-1)                        # 1-D SMEM (avoids 2-D padding)

    # Dropout keep mask (training, p=0.5) as uint8; scaled by the constant 1/(1-p) in the kernel.
    # TODO(synk): could be generated in-kernel with pltpu.prng_seed/prng_random_bits on hardware.
    drop_u8 = jax.random.bernoulli(dropout_key, 1.0 - DROP_P, (n, f_out)).astype(jnp.uint8)

    x_bf = x.astype(jnp.bfloat16)
    w_bf = w.astype(jnp.bfloat16)
    att_src8 = jnp.broadcast_to(att_src, (SUBLANES, f_out))       # sublane-aligned tiny operand

    # ---- kernel 1: projection + per-destination attention scalar -------------------------------
    h, a_dst = pl.pallas_call(
        project_kernel,
        out_shape=(
            jax.ShapeDtypeStruct((n, f_out), jnp.bfloat16),
            jax.ShapeDtypeStruct((n, 1), jnp.float32),
        ),
        grid=(nrt,),
        in_specs=[
            pl.BlockSpec((tm, f_in), lambda i: (i, 0)),
            pl.BlockSpec((f_in, f_out), lambda i: (0, 0)),
            pl.BlockSpec((1, f_out), lambda i: (0, 0)),
        ],
        out_specs=(
            pl.BlockSpec((tm, f_out), lambda i: (i, 0)),
            pl.BlockSpec((tm, 1), lambda i: (i, 0)),
        ),
        compiler_params=pltpu.CompilerParams(dimension_semantics=("parallel",)),
    )(x_bf, w_bf, att_dst)

    # ---- kernel 2: block-sparse online-softmax attention + bias/dropout/L2-normalize -----------
    out = pl.pallas_call(
        attend_kernel,
        out_shape=jax.ShapeDtypeStruct((n, f_out), jnp.float32),
        grid_spec=pltpu.PrefetchScalarGridSpec(
            num_scalar_prefetch=2,
            grid=(nrt, kmax),
            in_specs=[
                pl.BlockSpec((tm, 1), lambda i, k, kidx, cnt: (i, 0)),           # a_dst . h_i
                pl.BlockSpec((SUBLANES, f_out), lambda i, k, kidx, cnt: (0, 0)),  # att_src
                _block_spec((tm, tk), lambda i, k, kidx, cnt: (i, kidx[i * kmax + k]),
                            buffer_depth=3),                                     # adjacency int8
                _block_spec((tk, f_out), lambda i, k, kidx, cnt: (kidx[i * kmax + k], 0),
                            buffer_depth=3),                                     # h column tile
                pl.BlockSpec((1, f_out), lambda i, k, kidx, cnt: (0, 0)),        # bias
                pl.BlockSpec((tm, f_out), lambda i, k, kidx, cnt: (i, 0)),       # dropout keep u8
            ],
            out_specs=pl.BlockSpec((tm, f_out), lambda i, k, kidx, cnt: (i, 0)),
            scratch_shapes=[
                pltpu.VMEM((tm, 1), jnp.float32),       # running max m
                pltpu.VMEM((tm, 1), jnp.float32),       # running denominator l
                pltpu.VMEM((tm, f_out), jnp.float32),   # running accumulator
            ],
        ),
        compiler_params=pltpu.CompilerParams(
            dimension_semantics=("parallel", "arbitrary"),
            # ~1 MiB live per step at tm=tk=256, f_out=128; 32 MiB is safe headroom even on
            # v7x (64 MiB physical VMEM) and leaves room to grow f_out / tile sizes.
            vmem_limit_bytes=32 * 1024 * 1024,
        ),
    )(kidx, counts, a_dst, att_src8, adj8, h, bias, drop_u8)
    return out


if __name__ == "__main__":
    N, F_IN, F_OUT, E = 512, 64, 128, 2048

    key = jax.random.PRNGKey(0)
    kx, ksrc, kdst, kw, ksa, kda, kdrop = jax.random.split(key, 7)

    # Inputs.  Destinations are restricted to [0, N/2) so at least one adjacency tile is empty and
    # the block-sparse skip path (including a padded reduction step) is actually exercised.
    x = jax.random.normal(kx, (N, F_IN), dtype=jnp.float32)
    src = jax.random.randint(ksrc, (E,), 0, N, dtype=jnp.int32)
    dst = jax.random.randint(kdst, (E,), 0, N // 2, dtype=jnp.int32)
    edge_index = jnp.stack([src, dst])

    # Deterministic parameter init (glorot-style, as GATConv would do).
    w_scale = (2.0 / (F_IN + F_OUT)) ** 0.5
    a_scale = (2.0 / (1 + F_OUT)) ** 0.5
    w = w_scale * jax.random.normal(kw, (F_IN, F_OUT), dtype=jnp.float32)
    att_src = a_scale * jax.random.normal(ksa, (1, F_OUT), dtype=jnp.float32)
    att_dst = a_scale * jax.random.normal(kda, (1, F_OUT), dtype=jnp.float32)
    bias = jnp.zeros((1, F_OUT), dtype=jnp.float32)

    out = graph_conv_forward(x, edge_index, w, att_src, att_dst, bias, kdrop)
    out = jax.block_until_ready(out)

    assert out.shape == (N, F_OUT) and out.dtype == jnp.float32
    assert bool(jnp.all(jnp.isfinite(out)))
    print("KERNEL_OK")
</pallas_src>

<mosaic_0001>
module attributes {stable_mosaic.version = 11 : i64} {
  func.func @project_kernel(%arg0: i32, %arg1: memref<256x64xbf16, #tpu.memory_space<vmem>>, %arg2: memref<64x128xbf16, #tpu.memory_space<vmem>>, %arg3: memref<1x128xf32, #tpu.memory_space<vmem>>, %arg4: memref<256x128xbf16, #tpu.memory_space<vmem>>, %arg5: memref<256x1xf32, #tpu.memory_space<vmem>>) attributes {dimension_semantics = [#tpu.dimension_semantics<parallel>], iteration_bounds = array<i64: 2>, scalar_prefetch = 0 : i64, scratch_operands = 0 : i64, tpu.core_type = #tpu.core_type<tc>, window_params = [{transform_indices = @transform_0, window_bounds = array<i64: 256, 64>}, {pipeline_mode = #tpu.pipeline_mode<synchronous>, transform_indices = @transform_1, window_bounds = array<i64: 64, 128>}, {pipeline_mode = #tpu.pipeline_mode<synchronous>, transform_indices = @transform_2, window_bounds = array<i64: 1, 128>}, {transform_indices = @transform_3, window_bounds = array<i64: 256, 128>}, {transform_indices = @transform_4, window_bounds = array<i64: 256, 1>}]} {
    %c0 = arith.constant 0 : index
    %c0_0 = arith.constant 0 : index
    %0 = vector.load %arg1[%c0, %c0_0] : memref<256x64xbf16, #tpu.memory_space<vmem>>, vector<256x64xbf16>
    %c0_1 = arith.constant 0 : index
    %c0_2 = arith.constant 0 : index
    %1 = vector.load %arg2[%c0_1, %c0_2] : memref<64x128xbf16, #tpu.memory_space<vmem>>, vector<64x128xbf16>
    %cst = arith.constant dense<0.000000e+00> : vector<256x128xf32>
    %2 = tpu.matmul %0, %1, %cst {dimension_numbers = #tpu.dot_dimension_numbers<[1], [0], [0], [1], [0, 0, 1, 1], [], []>} : vector<256x64xbf16>, vector<64x128xbf16>, vector<256x128xf32> -> vector<256x128xf32>
    %3 = arith.truncf %2 : vector<256x128xf32> to vector<256x128xbf16>
    %c0_3 = arith.constant 0 : index
    %c0_4 = arith.constant 0 : index
    %4 = vector.load %arg4[%c0_3, %c0_4] : memref<256x128xbf16, #tpu.memory_space<vmem>>, vector<256x128xbf16>
    tpu.vector_store %arg4[%c0_3, %c0_4], %3 {strides = array<i32>} : memref<256x128xbf16, #tpu.memory_space<vmem>>, vector<256x128xbf16>,
    %c0_5 = arith.constant 0 : index
    %c0_6 = arith.constant 0 : index
    %5 = vector.load %arg3[%c0_5, %c0_6] : memref<1x128xf32, #tpu.memory_space<vmem>>, vector<1x128xf32>
    %6 = vector.broadcast %5 : vector<1x128xf32> to vector<256x128xf32>
    %7 = arith.mulf %2, %6 : vector<256x128xf32>
    %cst_7 = arith.constant dense<0.000000e+00> : vector<256xf32>
    %8 = vector.multi_reduction <add>, %7, %cst_7 [1] : vector<256x128xf32> to vector<256xf32>
    %9 = vector.shape_cast %8 : vector<256xf32> to vector<256x1xf32>
    %c0_8 = arith.constant 0 : index
    %c0_9 = arith.constant 0 : index
    %10 = vector.load %arg5[%c0_8, %c0_9] : memref<256x1xf32, #tpu.memory_space<vmem>>, vector<256x1xf32>
    tpu.vector_store %arg5[%c0_8, %c0_9], %9 {strides = array<i32>} : memref<256x1xf32, #tpu.memory_space<vmem>>, vector<256x1xf32>,
    return
  }
  func.func @transform_0(%arg0: i32) -> (i32, i32) {
    %c0_i32 = arith.constant 0 : i32
    %c0_i32_0 = arith.constant 0 : i32
    return %arg0, %c0_i32 : i32, i32
  }
  func.func @transform_1(%arg0: i32) -> (i32, i32) {
    %c0_i32 = arith.constant 0 : i32
    %c0_i32_0 = arith.constant 0 : i32
    %c0_i32_1 = arith.constant 0 : i32
    return %c0_i32, %c0_i32_0 : i32, i32
  }
  func.func @transform_2(%arg0: i32) -> (i32, i32) {
    %c0_i32 = arith.constant 0 : i32
    %c0_i32_0 = arith.constant 0 : i32
    %c0_i32_1 = arith.constant 0 : i32
    return %c0_i32, %c0_i32_0 : i32, i32
  }
  func.func @transform_3(%arg0: i32) -> (i32, i32) {
    %c0_i32 = arith.constant 0 : i32
    %c0_i32_0 = arith.constant 0 : i32
    return %arg0, %c0_i32 : i32, i32
  }
  func.func @transform_4(%arg0: i32) -> (i32, i32) {
    %c0_i32 = arith.constant 0 : i32
    %c0_i32_0 = arith.constant 0 : i32
    return %arg0, %c0_i32 : i32, i32
  }
}

</mosaic_0001>

<llo_original>
// kernel: tpu_custom_call.1
$region0: #{tpu_custom_call.1}
  #allocation0 [shape = 'u32[]', space=smem, size = 0x4, offset = 0x4, fixed_abs, tag = 'smem constant byte address 0x4 - core index']
  #allocation1 [shape = 'u32[72,128]{1,0:T(1,128)}', space=vmem, size = 0x9000, scoped, tag = 'internal scratch']
  %s0 = inlined_call_operand.vmem [shape: bf16[512,64], index: 0, kind: input, shape index: {}]
  %s1 = inlined_call_operand.vmem [shape: bf16[64,128], index: 1, kind: input, shape index: {}]
  %s2 = inlined_call_operand.vmem [shape: f32[1,128], index: 2, kind: input, shape index: {}]
  %s3 = inlined_call_operand.hbm [shape: bf16[512,128], index: 3, kind: output, shape index: {0}]
  %s4 = inlined_call_operand.vmem [shape: f32[512,1], index: 4, kind: output, shape index: {1}]
  %5 = xla_tuple %s3, %s4
  %s6 = sld [smem:[#allocation0]]
  $region53: #{tpu_custom_call.1} parent=0
    _
  %s8 = ssub.s32 1, %s6
  %s9 = scalar_select 0, %s8, %s6
  $region1: #{tpu_custom_call.1} parent=0
    #allocation2 [shape = 'u8[131072]{0}', space=vmem, size = 0x20000, scoped, tag = 'output window, operand 0']
    #allocation3 [shape = 's32[2]{0}', space=sflag, size = 0x8, scoped, tag = 'scoped memory for tpu_custom_call.1']
    %10 = vsyncpa [#allocation3], 0
    %s11 = scalar_lea.sflag [#allocation3], 1
    %12 = vsyncpa %s11, 0
    loop: start=0, step=1, limit=4
    $region2: #{tpu_custom_call.1} parent=1 // loop_pre_header
      _
    $region3: #{tpu_custom_call.1} parent=1 // loop_header
      %s14 = sphi 0, %s18
      %p15 = scmp.ge.s32.totalorder %s14, 4
      %s24 = sphi 0, %s26
      %s27 = sphi 0, %s24
      %s28 = sphi 0, %s27
      %s44 = sphi 0, %s28
      %s48 = sphi 0, %s48
      %s50 = sphi 0, %s48
      %s51 = sphi 0, %s50
      %s65 = sphi 0, %s51
      %s69 = sphi 0, %s69
      %s71 = sphi 0, %s69
      %s72 = sphi 0, %s71
      %s86 = sphi 0, %s72
      %s92 = sphi 0, %s94
      %s95 = sphi 0, %s92
      %s96 = sphi 0, %s95
      %s112 = sphi 0, %s96
      %s118 = sphi 0, %s120
      %s121 = sphi 0, %s118
      %s122 = sphi 0, %s121
      %s138 = sphi 0, %s122
    $region4: #{tpu_custom_call.1} parent=1 // loop_header_branch
      %17 = sbr.rel (%p15) target = $region8
    $region5: #{tpu_custom_call.1} parent=1 // loop_body
      %s19 = ssub.s32 %s14, 1
      %s20 = ssub.s32 %s14, 2
      %s21 = sadd.s32 %s14, 1
      %s22 = ssub.s32 %s14, %s21
      %p23 = scmp.eq.s32.totalorder %s22, 0
      %s25 = sadd.s32 %s24, 1
      %s26 = scalar_select %p23, %s24, %s25
      %p29 = pneg %p23
      %p30 = scmp.eq.s32.totalorder %s14, 1
      %p31 = por %p29, %p30
      %p32 = scmp.ne.s32.totalorder %s24, %s27
      %p33 = scmp.eq.s32.totalorder %s14, 0
      %p34 = por %p32, %p33
      %p35 = scmp.ne.s32.totalorder %s24, %s27
      %p36 = scmp.eq.s32.totalorder %s19, 1
      %p37 = por %p35, %p36
      %p38 = scmp.ne.s32.totalorder %s27, %s28
      %p39 = scmp.eq.s32.totalorder %s19, 0
      %p40 = por %p38, %p39
      %p41 = scmp.ne.s32.totalorder %s27, %s28
      %p42 = scmp.eq.s32.totalorder %s20, 1
      %p43 = por %p41, %p42
      %p45 = scmp.ne.s32.totalorder %s28, %s44
      %p46 = scmp.eq.s32.totalorder %s20, 0
      %p47 = por %p45, %p46
      %s49 = sadd.s32 %s48, 1
      %p52 = scmp.eq.s32.totalorder %s14, 1
      %p53 = scmp.ne.s32.totalorder %s48, %s50
      %p54 = scmp.eq.s32.totalorder %s14, 0
      %p55 = por %p53, %p54
      %p56 = scmp.ne.s32.totalorder %s48, %s50
      %p57 = scmp.eq.s32.totalorder %s19, 1
      %p58 = por %p56, %p57
      %p59 = scmp.ne.s32.totalorder %s50, %s51
      %p60 = scmp.eq.s32.totalorder %s19, 0
      %p61 = por %p59, %p60
      %p62 = scmp.ne.s32.totalorder %s50, %s51
      %p63 = scmp.eq.s32.totalorder %s20, 1
      %p64 = por %p62, %p63
      %p66 = scmp.ne.s32.totalorder %s51, %s65
      %p67 = scmp.eq.s32.totalorder %s20, 0
      %p68 = por %p66, %p67
      %s70 = sadd.s32 %s69, 1
      %p73 = scmp.eq.s32.totalorder %s14, 1
      %p74 = scmp.ne.s32.totalorder %s69, %s71
      %p75 = scmp.eq.s32.totalorder %s14, 0
      %p76 = por %p74, %p75
      %p77 = scmp.ne.s32.totalorder %s69, %s71
      %p78 = scmp.eq.s32.totalorder %s19, 1
      %p79 = por %p77, %p78
      %p80 = scmp.ne.s32.totalorder %s71, %s72
      %p81 = scmp.eq.s32.totalorder %s19, 0
      %p82 = por %p80, %p81
      %p83 = scmp.ne.s32.totalorder %s71, %s72
      %p84 = scmp.eq.s32.totalorder %s20, 1
      %p85 = por %p83, %p84
      %p87 = scmp.ne.s32.totalorder %s72, %s86
      %p88 = scmp.eq.s32.totalorder %s20, 0
      %p89 = por %p87, %p88
      %s90 = ssub.s32 %s14, %s21
      %p91 = scmp.eq.s32.totalorder %s90, 0
      %s93 = sadd.s32 %s92, 1
      %s94 = scalar_select %p91, %s92, %s93
      %p97 = pneg %p91
      %p98 = scmp.eq.s32.totalorder %s14, 1
      %p99 = por %p97, %p98
      %p100 = scmp.ne.s32.totalorder %s92, %s95
      %p101 = scmp.eq.s32.totalorder %s14, 0
      %p102 = por %p100, %p101
      %p103 = scmp.ne.s32.totalorder %s92, %s95
      %p104 = scmp.eq.s32.totalorder %s19, 1
      %p105 = por %p103, %p104
      %p106 = scmp.ne.s32.totalorder %s95, %s96
      %p107 = scmp.eq.s32.totalorder %s19, 0
      %p108 = por %p106, %p107
      %p109 = scmp.ne.s32.totalorder %s95, %s96
      %p110 = scmp.eq.s32.totalorder %s20, 1
      %p111 = por %p109, %p110
      %p113 = scmp.ne.s32.totalorder %s96, %s112
      %p114 = scmp.eq.s32.totalorder %s20, 0
      %p115 = por %p113, %p114
      %s116 = ssub.s32 %s14, %s21
      %p117 = scmp.eq.s32.totalorder %s116, 0
      %s119 = sadd.s32 %s118, 1
      %s120 = scalar_select %p117, %s118, %s119
      %p123 = pneg %p117
      %p124 = scmp.eq.s32.totalorder %s14, 1
      %p125 = por %p123, %p124
      %p126 = scmp.ne.s32.totalorder %s118, %s121
      %p127 = scmp.eq.s32.totalorder %s14, 0
      %p128 = por %p126, %p127
      %p129 = scmp.ne.s32.totalorder %s118, %s121
      %p130 = scmp.eq.s32.totalorder %s19, 1
      %p131 = por %p129, %p130
      %p132 = scmp.ne.s32.totalorder %s121, %s122
      %p133 = scmp.eq.s32.totalorder %s19, 0
      %p134 = por %p132, %p133
      %p135 = scmp.ne.s32.totalorder %s121, %s122
      %p136 = scmp.eq.s32.totalorder %s20, 1
      %p137 = por %p135, %p136
      %p139 = scmp.ne.s32.totalorder %s122, %s138
      %p140 = scmp.eq.s32.totalorder %s20, 0
      %p141 = por %p139, %p140
      %p142 = scmp.le.s32.totalorder 1, %s14
      %p143 = scmp.lt.s32.totalorder %s14, 3
      %p144 = pnand %p142, %p143
      %p145 = pneg %p144
      // Predicated region
      $region9: #{tpu_custom_call.1} parent=5 // pred_check
        _
      $region10: #{tpu_custom_call.1} parent=5 // pred_check_branch
        %147 = sbr.rel (%p144) target = $region12
      $region11: #{tpu_custom_call.1} parent=5 // pred_region
        %s148 = ssub.s32 %s14, 1
        // Predicated region
        $region13: #{tpu_custom_call.1} parent=11 // pred_check
          %p149 = pneg %p61
        $region14: #{tpu_custom_call.1} parent=11 // pred_check_branch
          %151 = sbr.rel (%p149) target = $region16
        $region15: #{tpu_custom_call.1} parent=11 // pred_region
          _
        $region16: #{tpu_custom_call.1} parent=11 // pred_fallthru
          _
        // Predicated region
        $region17: #{tpu_custom_call.1} parent=11 // pred_check
          %p152 = pneg %p82
        $region18: #{tpu_custom_call.1} parent=11 // pred_check_branch
          %154 = sbr.rel (%p152) target = $region20
        $region19: #{tpu_custom_call.1} parent=11 // pred_region
          _
        $region20: #{tpu_custom_call.1} parent=11 // pred_fallthru
          _
      $region12: #{tpu_custom_call.1} parent=5 // pred_fallthru
        _
      %p155 = scmp.lt.s32.totalorder %s14, 2
      // Predicated region
      $region21: #{tpu_custom_call.1} parent=5 // pred_check
        %p156 = pneg %p155
      $region22: #{tpu_custom_call.1} parent=5 // pred_check_branch
        %158 = sbr.rel (%p156) target = $region24
      $region23: #{tpu_custom_call.1} parent=5 // pred_region
        // Predicated region
        $region25: #{tpu_custom_call.1} parent=23 // pred_check
          %p159 = pneg %p34
        $region26: #{tpu_custom_call.1} parent=23 // pred_check_branch
          %161 = sbr.rel (%p159) target = $region28
        $region27: #{tpu_custom_call.1} parent=23 // pred_region
          %s162 = smul.u32 32, %s14
          %p163 = scmp.lt.s32.totalorder %s162, 63
          %s164 = scalar_select %p163, %s162, 63
          %s165 = smul.addr %s164, 4
          %s166 = scalar_lea.vmem %s0, %s165
          %s167 = smul.u32 32, %s14
        $region28: #{tpu_custom_call.1} parent=23 // pred_fallthru
          _
      $region24: #{tpu_custom_call.1} parent=5 // pred_fallthru
        _
      %p168 = scmp.le.s32.totalorder 1, %s14
      %p169 = scmp.lt.s32.totalorder %s14, 3
      %p170 = pnand %p168, %p169
      %p171 = pneg %p170
      // Predicated region
      $region29: #{tpu_custom_call.1} parent=5 // pred_check
        _
      $region30: #{tpu_custom_call.1} parent=5 // pred_check_branch
        %173 = sbr.rel (%p170) target = $region32
      $region31: #{tpu_custom_call.1} parent=5 // pred_region
        %s174 = ssub.s32 %s14, 1
        %s175 = smul.u32 32, %s19
        %p176 = scmp.lt.s32.totalorder %s175, 63
        %s177 = scalar_select %p176, %s175, 63
        %s178 = smul.addr %s177, 4
        %s179 = scalar_lea.vmem %s0, %s178
        %p180 = pneg %p40
        %p181 = pneg %p37
        %p182 = pneg %p61
        %p183 = pneg %p58
        %p184 = pneg %p82
        %p185 = pneg %p79
        %p186 = pneg %p108
        %p187 = pneg %p105
        %s188 = sand.u32 %s95, 1
        %s189 = scalar_lea.sflag [#allocation3], %s188
        %s190 = sand.u32 %s95, 1
        %s191 = smul.addr %s190, 128
        %s192 = scalar_lea.vmem [#allocation2], %s191
        %p193 = pneg %p134
        %p194 = pneg %p131
        %s195 = smul.u32 32, %s19
        %p196 = scmp.lt.s32.totalorder %s195, 63
        %s197 = scalar_select %p196, %s195, 63
        %s198 = smul.addr %s197, 8
        %s199 = scalar_lea.vmem %s4, %s198
        %s200 = smul.u32 32, %s19
        %p201 = scmp.lt.s32.totalorder %s200, 63
        %s202 = scalar_select %p201, %s200, 63
        %s203 = smul.addr %s202, 4
        %s204 = scalar_lea.vmem %s0, %s203
        %s205 = smul.u32 32, %s19
        %s206 = smul.u32 32, %s19
        %s207 = smul.u32 32, %s19
        %p208 = scmp.lt.s32.totalorder %s207, 63
        %s209 = scalar_select %p208, %s207, 63
        %s210 = smul.addr %s209, 8
        %s211 = scalar_lea.vmem %s4, %s210
        %s212 = smul.u32 32, %s19
        %v214 = vld [vmem:[%s204] sm:$0xf]
        %v215 = vld [vmem:[%s204 + $0x4] sm:$0xf]
        %v216 = vld [vmem:[%s204 + $0x8] sm:$0xf]
        %v217 = vld [vmem:[%s204 + $0xc] sm:$0xf]
        %v218 = vld [vmem:[%s204 + $0x10] sm:$0xf]
        %v219 = vld [vmem:[%s204 + $0x14] sm:$0xf]
        %v220 = vld [vmem:[%s204 + $0x18] sm:$0xf]
        %v221 = vld [vmem:[%s204 + $0x1c] sm:$0xf]
        %v222 = vld [vmem:[%s204 + $0x20] sm:$0xf]
        %v223 = vld [vmem:[%s204 + $0x24] sm:$0xf]
        %v224 = vld [vmem:[%s204 + $0x28] sm:$0xf]
        %v225 = vld [vmem:[%s204 + $0x2c] sm:$0xf]
        %v226 = vld [vmem:[%s204 + $0x30] sm:$0xf]
        %v227 = vld [vmem:[%s204 + $0x34] sm:$0xf]
        %v228 = vld [vmem:[%s204 + $0x38] sm:$0xf]
        %v229 = vld [vmem:[%s204 + $0x3c] sm:$0xf]
        %v230 = vld [vmem:[%s204 + $0x40] sm:$0xf]
        %v231 = vld [vmem:[%s204 + $0x44] sm:$0xf]
        %v232 = vld [vmem:[%s204 + $0x48] sm:$0xf]
        %v233 = vld [vmem:[%s204 + $0x4c] sm:$0xf]
        %v234 = vld [vmem:[%s204 + $0x50] sm:$0xf]
        %v235 = vld [vmem:[%s204 + $0x54] sm:$0xf]
        %v236 = vld [vmem:[%s204 + $0x58] sm:$0xf]
        %v237 = vld [vmem:[%s204 + $0x5c] sm:$0xf]
        %v238 = vld [vmem:[%s204 + $0x60] sm:$0xf]
        %v239 = vld [vmem:[%s204 + $0x64] sm:$0xf]
        %v240 = vld [vmem:[%s204 + $0x68] sm:$0xf]
        %v241 = vld [vmem:[%s204 + $0x6c] sm:$0xf]
        %v242 = vld [vmem:[%s204 + $0x70] sm:$0xf]
        %v243 = vld [vmem:[%s204 + $0x74] sm:$0xf]
        %v244 = vld [vmem:[%s204 + $0x78] sm:$0xf]
        %v245 = vld [vmem:[%s204 + $0x7c] sm:$0xf]
        %v246 = vld [vmem:[%s1] sm:$0xf]
        %v247 = vld [vmem:[%s1 + $0x4] sm:$0xf]
        %v248 = vld [vmem:[%s1 + $0x8] sm:$0xf]
        %v249 = vld [vmem:[%s1 + $0xc] sm:$0xf]
        %v250 = vld [vmem:[%s1 + $0x10] sm:$0xf]
        %v251 = vld [vmem:[%s1 + $0x14] sm:$0xf]
        %v252 = vld [vmem:[%s1 + $0x18] sm:$0xf]
        %v253 = vld [vmem:[%s1 + $0x1c] sm:$0xf]
        %v286 = vunpack.c.l.b16 %v214
        %v287 = vunpack.c.l.b16 %v215
        %v288 = vunpack.c.l.b16 %v216
        %v289 = vunpack.c.l.b16 %v217
        %v290 = vunpack.c.l.b16 %v218
        %v291 = vunpack.c.l.b16 %v219
        %v292 = vunpack.c.l.b16 %v220
        %v293 = vunpack.c.l.b16 %v221
        %v294 = vunpack.c.l.b16 %v222
        %v295 = vunpack.c.l.b16 %v223
        %v296 = vunpack.c.l.b16 %v224
        %v297 = vunpack.c.l.b16 %v225
        %v298 = vunpack.c.l.b16 %v226
        %v299 = vunpack.c.l.b16 %v227
        %v300 = vunpack.c.l.b16 %v228
        %v301 = vunpack.c.l.b16 %v229
        %v302 = vunpack.c.l.b16 %v230
        %v303 = vunpack.c.l.b16 %v231
        %v304 = vunpack.c.l.b16 %v232
        %v305 = vunpack.c.l.b16 %v233
        %v306 = vunpack.c.l.b16 %v234
        %v307 = vunpack.c.l.b16 %v235
        %v308 = vunpack.c.l.b16 %v236
        %v309 = vunpack.c.l.b16 %v237
        %v310 = vunpack.c.l.b16 %v238
        %v311 = vunpack.c.l.b16 %v239
        %v312 = vunpack.c.l.b16 %v240
        %v313 = vunpack.c.l.b16 %v241
        %v314 = vunpack.c.l.b16 %v242
        %v315 = vunpack.c.l.b16 %v243
        %v316 = vunpack.c.l.b16 %v244
        %v317 = vunpack.c.l.b16 %v245
        %v318 = vpack.c.b16 %v287, %v286
        %v319 = vpack.c.b16 %v289, %v288
        %v320 = vpack.c.b16 %v291, %v290
        %v321 = vpack.c.b16 %v293, %v292
        %v322 = vpack.c.b16 %v295, %v294
        %v323 = vpack.c.b16 %v297, %v296
        %v324 = vpack.c.b16 %v299, %v298
        %v325 = vpack.c.b16 %v301, %v300
        %v326 = vpack.c.b16 %v303, %v302
        %v327 = vpack.c.b16 %v305, %v304
        %v328 = vpack.c.b16 %v307, %v306
        %v329 = vpack.c.b16 %v309, %v308
        %v330 = vpack.c.b16 %v311, %v310
        %v331 = vpack.c.b16 %v313, %v312
        %v332 = vpack.c.b16 %v315, %v314
        %v333 = vpack.c.b16 %v317, %v316
        %v342 = vunpack.c.l.b16 %v246
        %v343 = vunpack.c.l.b16 %v247
        %v344 = vunpack.c.l.b16 %v248
        %v345 = vunpack.c.l.b16 %v249
        %v346 = vunpack.c.l.b16 %v250
        %v347 = vunpack.c.l.b16 %v251
        %v348 = vunpack.c.l.b16 %v252
        %v349 = vunpack.c.l.b16 %v253
        %v350 = vpack.c.b16 %v343, %v342
        %v351 = vpack.c.b16 %v345, %v344
        %v352 = vpack.c.b16 %v347, %v346
        %v353 = vpack.c.b16 %v349, %v348
        %vm358 = vcmask 523264
        %v360 = vsel %vm358, %v318, 0
        %v363 = vsel %vm358, %v319, 0
        %v366 = vsel %vm358, %v320, 0
        %v369 = vsel %vm358, %v321, 0
        %v372 = vsel %vm358, %v322, 0
        %v375 = vsel %vm358, %v323, 0
        %v378 = vsel %vm358, %v324, 0
        %v381 = vsel %vm358, %v325, 0
        %v384 = vsel %vm358, %v326, 0
        %v387 = vsel %vm358, %v327, 0
        %v390 = vsel %vm358, %v328, 0
        %v393 = vsel %vm358, %v329, 0
        %v396 = vsel %vm358, %v330, 0
        %v399 = vsel %vm358, %v331, 0
        %v402 = vsel %vm358, %v332, 0
        %v405 = vsel %vm358, %v333, 0
        %407 = vmatpush.bf16.msra.mxu0 0
        %408 = vmatpush.bf16.msra.mxu0 0
        %409 = vmatpush.bf16.msra.mxu0 0
        %410 = vmatpush.bf16.msra.mxu0 0
        %411 = vmatpush.bf16.msra.mxu0 %v353
        %412 = vmatpush.bf16.msra.mxu0 %v352
        %413 = vmatpush.bf16.msra.mxu0 %v351
        %414 = vmatpush.bf16.msra.mxu0 %v350
        %415 = vmatmul.bf16.gmra.mxu0 %v360
        %v416 = vpop.f32.mrf.mxu0
        %v417 = vadd.f32 0.0, %v416
        %v418 = vpop.f32.mrf.mxu0
        %v419 = vadd.f32 0.0, %v418
        %420 = vmatmul.bf16.gmra.mxu0 %v363
        %v421 = vpop.f32.mrf.mxu0
        %v422 = vadd.f32 0.0, %v421
        %v423 = vpop.f32.mrf.mxu0
        %v424 = vadd.f32 0.0, %v423
        %425 = vmatmul.bf16.gmra.mxu0 %v366
        %v426 = vpop.f32.mrf.mxu0
        %v427 = vadd.f32 0.0, %v426
        %v428 = vpop.f32.mrf.mxu0
        %v429 = vadd.f32 0.0, %v428
        %430 = vmatmul.bf16.gmra.mxu0 %v369
        %v431 = vpop.f32.mrf.mxu0
        %v432 = vadd.f32 0.0, %v431
        %v433 = vpop.f32.mrf.mxu0
        %v434 = vadd.f32 0.0, %v433
        %435 = vmatmul.bf16.gmra.mxu0 %v372
        %v436 = vpop.f32.mrf.mxu0
        %v437 = vadd.f32 0.0, %v436
        %v438 = vpop.f32.mrf.mxu0
        %v439 = vadd.f32 0.0, %v438
        %440 = vmatmul.bf16.gmra.mxu0 %v375
        %v441 = vpop.f32.mrf.mxu0
        %v442 = vadd.f32 0.0, %v441
        %v443 = vpop.f32.mrf.mxu0
        %v444 = vadd.f32 0.0, %v443
        %445 = vmatmul.bf16.gmra.mxu0 %v378
        %v446 = vpop.f32.mrf.mxu0
        %v447 = vadd.f32 0.0, %v446
        %v448 = vpop.f32.mrf.mxu0
        %v449 = vadd.f32 0.0, %v448
        %450 = vmatmul.bf16.gmra.mxu0 %v381
        %v451 = vpop.f32.mrf.mxu0
        %v452 = vadd.f32 0.0, %v451
        %v453 = vpop.f32.mrf.mxu0
        %v454 = vadd.f32 0.0, %v453
        %455 = vmatmul.bf16.gmra.mxu0 %v384
        %v456 = vpop.f32.mrf.mxu0
        %v457 = vadd.f32 0.0, %v456
        %v458 = vpop.f32.mrf.mxu0
        %v459 = vadd.f32 0.0, %v458
        %460 = vmatmul.bf16.gmra.mxu0 %v387
        %v461 = vpop.f32.mrf.mxu0
        %v462 = vadd.f32 0.0, %v461
        %v463 = vpop.f32.mrf.mxu0
        %v464 = vadd.f32 0.0, %v463
        %465 = vmatmul.bf16.gmra.mxu0 %v390
        %v466 = vpop.f32.mrf.mxu0
        %v467 = vadd.f32 0.0, %v466
        %v468 = vpop.f32.mrf.mxu0
        %v469 = vadd.f32 0.0, %v468
        %470 = vmatmul.bf16.gmra.mxu0 %v393
        %v471 = vpop.f32.mrf.mxu0
        %v472 = vadd.f32 0.0, %v471
        %v473 = vpop.f32.mrf.mxu0
        %v474 = vadd.f32 0.0, %v473
        %475 = vmatmul.bf16.gmra.mxu0 %v396
        %v476 = vpop.f32.mrf.mxu0
        %v477 = vadd.f32 0.0, %v476
        %v478 = vpop.f32.mrf.mxu0
        %v479 = vadd.f32 0.0, %v478
        %480 = vmatmul.bf16.gmra.mxu0 %v399
        %v481 = vpop.f32.mrf.mxu0
        %v482 = vadd.f32 0.0, %v481
        %v483 = vpop.f32.mrf.mxu0
        %v484 = vadd.f32 0.0, %v483
        %485 = vmatmul.bf16.gmra.mxu0 %v402
        %v486 = vpop.f32.mrf.mxu0
        %v487 = vadd.f32 0.0, %v486
        %v488 = vpop.f32.mrf.mxu0
        %v489 = vadd.f32 0.0, %v488
        %490 = vmatmul.bf16.gmra.mxu0 %v405
        %v491 = vpop.f32.mrf.mxu0
        %v492 = vadd.f32 0.0, %v491
        %v493 = vpop.f32.mrf.mxu0
        %v494 = vadd.f32 0.0, %v493
        %495 = vdwg.mxu0
        %v496 = vpack.c.bf16 %v417, %v417
        %v497 = vpack.c.bf16 %v419, %v419
        %v498 = vpack.c.bf16 %v422, %v422
        %v499 = vpack.c.bf16 %v424, %v424
        %v500 = vpack.c.bf16 %v427, %v427
        %v501 = vpack.c.bf16 %v429, %v429
        %v502 = vpack.c.bf16 %v432, %v432
        %v503 = vpack.c.bf16 %v434, %v434
        %v504 = vpack.c.bf16 %v437, %v437
        %v505 = vpack.c.bf16 %v439, %v439
        %v506 = vpack.c.bf16 %v442, %v442
        %v507 = vpack.c.bf16 %v444, %v444
        %v508 = vpack.c.bf16 %v447, %v447
        %v509 = vpack.c.bf16 %v449, %v449
        %v510 = vpack.c.bf16 %v452, %v452
        %v511 = vpack.c.bf16 %v454, %v454
        %v512 = vpack.c.bf16 %v457, %v457
        %v513 = vpack.c.bf16 %v459, %v459
        %v514 = vpack.c.bf16 %v462, %v462
        %v515 = vpack.c.bf16 %v464, %v464
        %v516 = vpack.c.bf16 %v467, %v467
        %v517 = vpack.c.bf16 %v469, %v469
        %v518 = vpack.c.bf16 %v472, %v472
        %v519 = vpack.c.bf16 %v474, %v474
        %v520 = vpack.c.bf16 %v477, %v477
        %v521 = vpack.c.bf16 %v479, %v479
        %v522 = vpack.c.bf16 %v482, %v482
        %v523 = vpack.c.bf16 %v484, %v484
        %v524 = vpack.c.bf16 %v487, %v487
        %v525 = vpack.c.bf16 %v489, %v489
        %v526 = vpack.c.bf16 %v492, %v492
        %v527 = vpack.c.bf16 %v494, %v494
        %528 = vst [vmem:[%s192] sm:$0xf] %v496
        %529 = vst [vmem:[%s192 + $0x4] sm:$0xf] %v497
        %530 = vst [vmem:[%s192 + $0x8] sm:$0xf] %v498
        %531 = vst [vmem:[%s192 + $0xc] sm:$0xf] %v499
        %532 = vst [vmem:[%s192 + $0x10] sm:$0xf] %v500
        %533 = vst [vmem:[%s192 + $0x14] sm:$0xf] %v501
        %534 = vst [vmem:[%s192 + $0x18] sm:$0xf] %v502
        %535 = vst [vmem:[%s192 + $0x1c] sm:$0xf] %v503
        %536 = vst [vmem:[%s192 + $0x20] sm:$0xf] %v504
        %537 = vst [vmem:[%s192 + $0x24] sm:$0xf] %v505
        %538 = vst [vmem:[%s192 + $0x28] sm:$0xf] %v506
        %539 = vst [vmem:[%s192 + $0x2c] sm:$0xf] %v507
        %540 = vst [vmem:[%s192 + $0x30] sm:$0xf] %v508
        %541 = vst [vmem:[%s192 + $0x34] sm:$0xf] %v509
        %542 = vst [vmem:[%s192 + $0x38] sm:$0xf] %v510
        %543 = vst [vmem:[%s192 + $0x3c] sm:$0xf] %v511
        %544 = vst [vmem:[%s192 + $0x40] sm:$0xf] %v512
        %545 = vst [vmem:[%s192 + $0x44] sm:$0xf] %v513
        %546 = vst [vmem:[%s192 + $0x48] sm:$0xf] %v514
        %547 = vst [vmem:[%s192 + $0x4c] sm:$0xf] %v515
        %548 = vst [vmem:[%s192 + $0x50] sm:$0xf] %v516
        %549 = vst [vmem:[%s192 + $0x54] sm:$0xf] %v517
        %550 = vst [vmem:[%s192 + $0x58] sm:$0xf] %v518
        %551 = vst [vmem:[%s192 + $0x5c] sm:$0xf] %v519
        %552 = vst [vmem:[%s192 + $0x60] sm:$0xf] %v520
        %553 = vst [vmem:[%s192 + $0x64] sm:$0xf] %v521
        %554 = vst [vmem:[%s192 + $0x68] sm:$0xf] %v522
        %555 = vst [vmem:[%s192 + $0x6c] sm:$0xf] %v523
        %556 = vst [vmem:[%s192 + $0x70] sm:$0xf] %v524
        %557 = vst [vmem:[%s192 + $0x74] sm:$0xf] %v525
        %558 = vst [vmem:[%s192 + $0x78] sm:$0xf] %v526
        %559 = vst [vmem:[%s192 + $0x7c] sm:$0xf] %v527
        %v560 = vld [vmem:[%s2] sm:$0x1]
        %v562 = vperm.slane %v560, 0
        %v564 = vmul.f32 %v417, %v562
        %v565 = vmul.f32 %v419, %v562
        %v566 = vmul.f32 %v422, %v562
        %v567 = vmul.f32 %v424, %v562
        %v568 = vmul.f32 %v427, %v562
        %v569 = vmul.f32 %v429, %v562
        %v570 = vmul.f32 %v432, %v562
        %v571 = vmul.f32 %v434, %v562
        %v572 = vmul.f32 %v437, %v562
        %v573 = vmul.f32 %v439, %v562
        %v574 = vmul.f32 %v442, %v562
        %v575 = vmul.f32 %v444, %v562
        %v576 = vmul.f32 %v447, %v562
        %v577 = vmul.f32 %v449, %v562
        %v578 = vmul.f32 %v452, %v562
        %v579 = vmul.f32 %v454, %v562
        %v580 = vmul.f32 %v457, %v562
        %v581 = vmul.f32 %v459, %v562
        %v582 = vmul.f32 %v462, %v562
        %v583 = vmul.f32 %v464, %v562
        %v584 = vmul.f32 %v467, %v562
        %v585 = vmul.f32 %v469, %v562
        %v586 = vmul.f32 %v472, %v562
        %v587 = vmul.f32 %v474, %v562
        %v588 = vmul.f32 %v477, %v562
        %v589 = vmul.f32 %v479, %v562
        %v590 = vmul.f32 %v482, %v562
        %v591 = vmul.f32 %v484, %v562
        %v592 = vmul.f32 %v487, %v562
        %v593 = vmul.f32 %v489, %v562
        %v594 = vmul.f32 %v492, %v562
        %v595 = vmul.f32 %v494, %v562
        %596 = vadd.xlane.f32.xlu0 %v564
        %v597 = vpop.xlane.xlu0 %596
        %598 = vadd.xlane.f32.xlu0 %v565
        %v599 = vpop.xlane.xlu0 %598
        %600 = vadd.xlane.f32.xlu0 %v566
        %v601 = vpop.xlane.xlu0 %600
        %602 = vadd.xlane.f32.xlu0 %v567
        %v603 = vpop.xlane.xlu0 %602
        %604 = vadd.xlane.f32.xlu0 %v568
        %v605 = vpop.xlane.xlu0 %604
        %606 = vadd.xlane.f32.xlu0 %v569
        %v607 = vpop.xlane.xlu0 %606
        %608 = vadd.xlane.f32.xlu0 %v570
        %v609 = vpop.xlane.xlu0 %608
        %610 = vadd.xlane.f32.xlu0 %v571
        %v611 = vpop.xlane.xlu0 %610
        %612 = vadd.xlane.f32.xlu0 %v572
        %v613 = vpop.xlane.xlu0 %612
        %614 = vadd.xlane.f32.xlu0 %v573
        %v615 = vpop.xlane.xlu0 %614
        %616 = vadd.xlane.f32.xlu0 %v574
        %v617 = vpop.xlane.xlu0 %616
        %618 = vadd.xlane.f32.xlu0 %v575
        %v619 = vpop.xlane.xlu0 %618
        %620 = vadd.xlane.f32.xlu0 %v576
        %v621 = vpop.xlane.xlu0 %620
        %622 = vadd.xlane.f32.xlu0 %v577
        %v623 = vpop.xlane.xlu0 %622
        %624 = vadd.xlane.f32.xlu0 %v578
        %v625 = vpop.xlane.xlu0 %624
        %626 = vadd.xlane.f32.xlu0 %v579
        %v627 = vpop.xlane.xlu0 %626
        %628 = vadd.xlane.f32.xlu0 %v580
        %v629 = vpop.xlane.xlu0 %628
        %630 = vadd.xlane.f32.xlu0 %v581
        %v631 = vpop.xlane.xlu0 %630
        %632 = vadd.xlane.f32.xlu0 %v582
        %v633 = vpop.xlane.xlu0 %632
        %634 = vadd.xlane.f32.xlu0 %v583
        %v635 = vpop.xlane.xlu0 %634
        %636 = vadd.xlane.f32.xlu0 %v584
        %v637 = vpop.xlane.xlu0 %636
        %638 = vadd.xlane.f32.xlu0 %v585
        %v639 = vpop.xlane.xlu0 %638
        %640 = vadd.xlane.f32.xlu0 %v586
        %v641 = vpop.xlane.xlu0 %640
        %642 = vadd.xlane.f32.xlu0 %v587
        %v643 = vpop.xlane.xlu0 %642
        %644 = vadd.xlane.f32.xlu0 %v588
        %v645 = vpop.xlane.xlu0 %644
        %646 = vadd.xlane.f32.xlu0 %v589
        %v647 = vpop.xlane.xlu0 %646
        %648 = vadd.xlane.f32.xlu0 %v590
        %v649 = vpop.xlane.xlu0 %648
        %650 = vadd.xlane.f32.xlu0 %v591
        %v651 = vpop.xlane.xlu0 %650
        %652 = vadd.xlane.f32.xlu0 %v592
        %v653 = vpop.xlane.xlu0 %652
        %654 = vadd.xlane.f32.xlu0 %v593
        %v655 = vpop.xlane.xlu0 %654
        %656 = vadd.xlane.f32.xlu0 %v594
        %v657 = vpop.xlane.xlu0 %656
        %658 = vadd.xlane.f32.xlu0 %v595
        %v659 = vpop.xlane.xlu0 %658
        %vm660 = vcmask 7168
        %661 = vst.msk [vmem:[%s211] sm:$0xff] %vm660, %v597
        %662 = vst.msk [vmem:[%s211 + $0x8] sm:$0xff] %vm660, %v599
        %663 = vst.msk [vmem:[%s211 + $0x10] sm:$0xff] %vm660, %v601
        %664 = vst.msk [vmem:[%s211 + $0x18] sm:$0xff] %vm660, %v603
        %665 = vst.msk [vmem:[%s211 + $0x20] sm:$0xff] %vm660, %v605
        %666 = vst.msk [vmem:[%s211 + $0x28] sm:$0xff] %vm660, %v607
        %667 = vst.msk [vmem:[%s211 + $0x30] sm:$0xff] %vm660, %v609
        %668 = vst.msk [vmem:[%s211 + $0x38] sm:$0xff] %vm660, %v611
        %669 = vst.msk [vmem:[%s211 + $0x40] sm:$0xff] %vm660, %v613
        %670 = vst.msk [vmem:[%s211 + $0x48] sm:$0xff] %vm660, %v615
        %671 = vst.msk [vmem:[%s211 + $0x50] sm:$0xff] %vm660, %v617
        %672 = vst.msk [vmem:[%s211 + $0x58] sm:$0xff] %vm660, %v619
        %673 = vst.msk [vmem:[%s211 + $0x60] sm:$0xff] %vm660, %v621
        %674 = vst.msk [vmem:[%s211 + $0x68] sm:$0xff] %vm660, %v623
        %675 = vst.msk [vmem:[%s211 + $0x70] sm:$0xff] %vm660, %v625
        %676 = vst.msk [vmem:[%s211 + $0x78] sm:$0xff] %vm660, %v627
        %677 = vst.msk [vmem:[%s211 + $0x80] sm:$0xff] %vm660, %v629
        %678 = vst.msk [vmem:[%s211 + $0x88] sm:$0xff] %vm660, %v631
        %679 = vst.msk [vmem:[%s211 + $0x90] sm:$0xff] %vm660, %v633
        %680 = vst.msk [vmem:[%s211 + $0x98] sm:$0xff] %vm660, %v635
        %681 = vst.msk [vmem:[%s211 + $0xa0] sm:$0xff] %vm660, %v637
        %682 = vst.msk [vmem:[%s211 + $0xa8] sm:$0xff] %vm660, %v639
        %683 = vst.msk [vmem:[%s211 + $0xb0] sm:$0xff] %vm660, %v641
        %684 = vst.msk [vmem:[%s211 + $0xb8] sm:$0xff] %vm660, %v643
        %685 = vst.msk [vmem:[%s211 + $0xc0] sm:$0xff] %vm660, %v645
        %686 = vst.msk [vmem:[%s211 + $0xc8] sm:$0xff] %vm660, %v647
        %687 = vst.msk [vmem:[%s211 + $0xd0] sm:$0xff] %vm660, %v649
        %688 = vst.msk [vmem:[%s211 + $0xd8] sm:$0xff] %vm660, %v651
        %689 = vst.msk [vmem:[%s211 + $0xe0] sm:$0xff] %vm660, %v653
        %690 = vst.msk [vmem:[%s211 + $0xe8] sm:$0xff] %vm660, %v655
        %691 = vst.msk [vmem:[%s211 + $0xf0] sm:$0xff] %vm660, %v657
        %692 = vst.msk [vmem:[%s211 + $0xf8] sm:$0xff] %vm660, %v659
        %s693 = sand.u32 %s95, 1
        %s694 = scalar_lea.sflag [#allocation3], %s693
        %s695 = sand.u32 %s95, 1
        %s696 = smul.addr %s695, 128
        %s697 = scalar_lea.vmem [#allocation2], %s696
        %s698 = smul.u32 32, %s19
        %p699 = scmp.lt.s32.totalorder %s698, 63
        %s700 = scalar_select %p699, %s698, 63
        %s701 = smul.addr %s700, 8
        %s702 = scalar_lea.vmem %s4, %s701
        // Predicated region
        $region33: #{tpu_custom_call.1} parent=31 // pred_check
          %p703 = pneg %p105
        $region34: #{tpu_custom_call.1} parent=31 // pred_check_branch
          %705 = sbr.rel (%p703) target = $region36
        $region35: #{tpu_custom_call.1} parent=31 // pred_region
          %s706 = smul.u32 32, %s19
          %708 = vsyncadd %s694, 0
          %s709 = smul.addr %s706, 4
          %s710 = scalar_lea.hbm %s3, %s709
          %s711 = sshll.u32 %s697, 4
          %s712 = int_to_ptr.vmem [resolvable:$true] %s711
          %s713 = sshll.u32 %s710, 4
          %s714 = int_to_ptr.hbm [resolvable:$true] %s713
          %719 = dma.vmem_to_hbm [thread:$0]  %s712, 2048, %s714, %s694, 64, 64, 4
        $region36: #{tpu_custom_call.1} parent=31 // pred_fallthru
          _
        // Predicated region
        $region37: #{tpu_custom_call.1} parent=31 // pred_check
          %p720 = pneg %p131
        $region38: #{tpu_custom_call.1} parent=31 // pred_check_branch
          %722 = sbr.rel (%p720) target = $region40
        $region39: #{tpu_custom_call.1} parent=31 // pred_region
          %s723 = smul.u32 32, %s19
        $region40: #{tpu_custom_call.1} parent=31 // pred_fallthru
          _
      $region32: #{tpu_custom_call.1} parent=5 // pred_fallthru
        _
      %p724 = scmp.le.s32.totalorder 2, %s14
      // Predicated region
      $region41: #{tpu_custom_call.1} parent=5 // pred_check
        %p725 = pneg %p724
      $region42: #{tpu_custom_call.1} parent=5 // pred_check_branch
        %727 = sbr.rel (%p725) target = $region44
      $region43: #{tpu_custom_call.1} parent=5 // pred_region
        %s728 = ssub.s32 %s14, 2
        // Predicated region
        $region45: #{tpu_custom_call.1} parent=43 // pred_check
          %p729 = pneg %p111
        $region46: #{tpu_custom_call.1} parent=43 // pred_check_branch
          %731 = sbr.rel (%p729) target = $region48
        $region47: #{tpu_custom_call.1} parent=43 // pred_region
          %s732 = sand.u32 %s96, 1
          %s733 = scalar_lea.sflag [#allocation3], %s732
          %s734 = sand.u32 %s96, 1
          %s735 = smul.addr %s734, 128
          %s736 = scalar_lea.vmem [#allocation2], %s735
          %738 = dma.done %s733, 2048
        $region48: #{tpu_custom_call.1} parent=43 // pred_fallthru
          _
        // Predicated region
        $region49: #{tpu_custom_call.1} parent=43 // pred_check
          %p739 = pneg %p137
        $region50: #{tpu_custom_call.1} parent=43 // pred_check_branch
          %741 = sbr.rel (%p739) target = $region52
        $region51: #{tpu_custom_call.1} parent=43 // pred_region
          %s742 = smul.u32 32, %s20
          %p743 = scmp.lt.s32.totalorder %s742, 63
          %s744 = scalar_select %p743, %s742, 63
          %s745 = smul.addr %s744, 8
          %s746 = scalar_lea.vmem %s4, %s745
        $region52: #{tpu_custom_call.1} parent=43 // pred_fallthru
          _
      $region44: #{tpu_custom_call.1} parent=5 // pred_fallthru
        _
    $region6: #{tpu_custom_call.1} parent=1 // loop_footer
      %s18 = sadd.s32 1, %s14
    $region7: #{tpu_custom_call.1} parent=1 // loop_footer_branch
      %13 = sbr.rel target = $region3
    $region8: #{tpu_custom_call.1} parent=1 // loop_exit
      _
    %747 = vsyncpa [#allocation3], 1
    %s748 = scalar_lea.sflag [#allocation3], 1
    %749 = vsyncpa %s748, 1

</llo_original>
